<compile_context>
chip_gen: v6e
topology: v6e:2x2x1
jax: 0.10.0
libtpu: 0.0.40
codegen_flags: <defaults>
</compile_context>

<pallas_src>
import jax
import jax.numpy as jnp
from jax.experimental import pallas as pl
from jax.experimental.pallas import tpu as pltpu


# Below this many elements (B*D) the per-call overhead dominates; let XLA fuse.
_MIN_PALLAS_ELEMS = 1 << 18

# Minimum per-step block size (bytes) so DMA time >> fixed grid-step cost.
_MIN_BLOCK_BYTES = 512 * 1024


def _round_up(n, m):
    return ((n + m - 1) // m) * m


def _sublane_for_dtype(dtype):
    itemsize = jnp.dtype(dtype).itemsize
    if itemsize >= 4:
        return 8
    if itemsize == 2:
        return 16
    return 32


def _tpu_vmem_capacity_bytes():
    """Best-effort VMEM capacity query; conservative fallback (v7x-safe)."""
    try:
        info = pltpu.get_tpu_info()
        cap = getattr(info, "vmem_capacity_bytes", None)
        if cap:
            return int(cap)
    except Exception:
        pass
    return 64 * 1024 * 1024


def _pick_tile_b(batch, D, dtype_bytes, sublane, vmem_budget, two_cores):
    """Largest sublane-aligned batch tile fitting the pipelined VMEM budget.

    two_cores: cap the tile at ceil(B/2) so megacore (v7x) gets >= 2 balanced
    blocks; single-TC parts get the largest tile (grid is a serial loop there).
    """
    b_cap = _round_up(batch, sublane)                 # never exceed the batch
    per_row = 6 * D * dtype_bytes                     # (x + out1 + out2) x double-buffer
    tile = (vmem_budget // per_row // sublane) * sublane
    tile = max(sublane, tile)
    tile = min(tile, b_cap)

    if two_cores:
        half = _round_up(pl.cdiv(batch, 2), sublane)  # >= 2 roughly-balanced steps
        tile = min(tile, max(half, sublane))

    # Minimum-block-bytes floor (when the batch allows it).
    row_bytes = max(1, D * dtype_bytes)
    min_rows = _round_up(pl.cdiv(_MIN_BLOCK_BYTES, row_bytes), sublane)
    if tile < min_rows:
        tile = min(min_rows, b_cap)
    return int(tile)


def _regulation_kernel(x_ref, g1_ref, g2_ref, out1_ref, out2_ref):
    # x_ref:   (tile_b, D)  batch tile of the input
    # g*_ref:  (1, D)       expanded softmax gates, broadcast over rows
    x = x_ref[...]
    out1_ref[...] = g1_ref[...] * x
    out2_ref[...] = g2_ref[...] * x


def regulation_module(x, g1_param, g2_param, *, num_fields, embedding_dim,
                      tau=1.0, tile_b=None, use_pallas=None):
    """Pallas implementation of RegulationModule.forward (use_bn=False)."""
    B, D = x.shape
    assert D == num_fields * embedding_dim

    # --- parameter glue (tiny, O(num_fields)) -------------------------------
    def expand_gate(g):
        g = jax.nn.softmax(g.astype(jnp.float32) / tau, axis=-1)  # (F,)
        g = jnp.repeat(g[:, None], embedding_dim, axis=1)         # (F, E)
        return g.reshape(1, D).astype(x.dtype)                    # (1, D)

    gate1 = expand_gate(g1_param)
    gate2 = expand_gate(g2_param)

    # --- tiny-problem fallback (avoid kernel-launch overhead) ---------------
    if use_pallas is None:
        use_pallas = (B * D) >= _MIN_PALLAS_ELEMS
    if not use_pallas:
        return gate1 * x, gate2 * x

    # --- generation-aware tiling policy --------------------------------------
    dtype_bytes = jnp.dtype(x.dtype).itemsize
    sublane = _sublane_for_dtype(x.dtype)
    vmem_cap = _tpu_vmem_capacity_bytes()
    if vmem_cap >= 96 * 1024 * 1024:
        # v5e / v6e: 128 MiB VMEM, single TensorCore -> big tiles, few steps.
        tile_budget = 56 * 1024 * 1024
        vmem_limit = 96 * 1024 * 1024
        two_cores = False
    else:
        # v7x: 64 MiB VMEM, 2 TensorCores -> balanced blocks across both.
        tile_budget = 24 * 1024 * 1024
        vmem_limit = 48 * 1024 * 1024
        two_cores = True

    if tile_b is None:
        tile_b = _pick_tile_b(B, D, dtype_bytes, sublane, tile_budget, two_cores)
    tile_b = max(sublane, (int(tile_b) // sublane) * sublane)

    # --- Pallas hot path -----------------------------------------------------
    # Last block-dim is the FULL feature dim D (no wrapper pad / output slice);
    # ragged final batch blocks are masked by Pallas.
    grid = (pl.cdiv(B, tile_b),)
    x_spec = pl.BlockSpec((tile_b, D), lambda i: (i, 0))
    g_spec = pl.BlockSpec((1, D), lambda i: (0, 0))  # grid-invariant gates

    out1, out2 = pl.pallas_call(
        _regulation_kernel,
        out_shape=(jax.ShapeDtypeStruct((B, D), x.dtype),
                   jax.ShapeDtypeStruct((B, D), x.dtype)),
        grid_spec=pltpu.PrefetchScalarGridSpec(
            num_scalar_prefetch=0,
            grid=grid,
            in_specs=[x_spec, g_spec, g_spec],
            out_specs=[x_spec, x_spec],
        ),
        compiler_params=pltpu.CompilerParams(
            dimension_semantics=("parallel",),
            vmem_limit_bytes=vmem_limit),
    )(x, gate1, gate2)

    return out1, out2


if __name__ == "__main__":
    key = jax.random.PRNGKey(0)
    kx, kg1, kg2 = jax.random.split(key, 3)

    # Small shapes consistent with the module: D = 5*24 = 120 is NOT a multiple
    # of 128 (exercises the full-D lane block with masked tail stores), and
    # B = 12 with tile_b = 8 exercises a ragged final batch block.
    B, F, E = 12, 5, 24
    D = F * E
    tau = 2.0

    x = jax.random.normal(kx, (B, D), dtype=jnp.float32)
    g1_param = jnp.ones((F,), jnp.float32) + 0.1 * jax.random.normal(kg1, (F,))
    g2_param = jnp.ones((F,), jnp.float32) + 0.1 * jax.random.normal(kg2, (F,))

    # Pure-JAX reference.
    def ref(xv, g, t, emb):
        gg = jax.nn.softmax(g / t, axis=-1)
        gg = jnp.repeat(gg[:, None], emb, axis=1).reshape(1, -1)
        return gg * xv

    # 1) Forced Pallas path, explicit small tile -> ragged last block.
    out1, out2 = regulation_module(x, g1_param, g2_param, num_fields=F,
                                   embedding_dim=E, tau=tau,
                                   use_pallas=True, tile_b=8)
    jax.block_until_ready((out1, out2))
    r1 = ref(x, g1_param, tau, E)
    r2 = ref(x, g2_param, tau, E)
    assert jnp.allclose(out1, r1, atol=1e-6, rtol=1e-6)
    assert jnp.allclose(out2, r2, atol=1e-6, rtol=1e-6)

    # 2) Forced Pallas path with the auto-picked tile size.
    a1, a2 = regulation_module(x, g1_param, g2_param, num_fields=F,
                               embedding_dim=E, tau=tau, use_pallas=True)
    jax.block_until_ready((a1, a2))
    assert jnp.allclose(a1, r1, atol=1e-6, rtol=1e-6)
    assert jnp.allclose(a2, r2, atol=1e-6, rtol=1e-6)

    # 3) Tiny-shape auto dispatch (plain XLA fusion path, no Pallas call).
    B2, F2, E2 = 8, 4, 32
    x2 = jax.random.normal(kx, (B2, F2 * E2), dtype=jnp.float32)
    s1, s2 = regulation_module(x2, g1_param[:F2], g2_param[:F2],
                               num_fields=F2, embedding_dim=E2, tau=1.0)
    jax.block_until_ready((s1, s2))
    assert jnp.allclose(s1, ref(x2, g1_param[:F2], 1.0, E2), atol=1e-6, rtol=1e-6)
    assert jnp.allclose(s2, ref(x2, g2_param[:F2], 1.0, E2), atol=1e-6, rtol=1e-6)

    print("KERNEL_OK")
</pallas_src>

<mosaic_0001>
module attributes {stable_mosaic.version = 11 : i64} {
  func.func @_regulation_kernel(%arg0: i32, %arg1: memref<8x120xf32, #tpu.memory_space<vmem>>, %arg2: memref<1x120xf32, #tpu.memory_space<vmem>>, %arg3: memref<1x120xf32, #tpu.memory_space<vmem>>, %arg4: memref<8x120xf32, #tpu.memory_space<vmem>>, %arg5: memref<8x120xf32, #tpu.memory_space<vmem>>) attributes {dimension_semantics = [#tpu.dimension_semantics<parallel>], iteration_bounds = array<i64: 2>, scalar_prefetch = 0 : i64, scratch_operands = 0 : i64, tpu.core_type = #tpu.core_type<tc>, window_params = [{transform_indices = @transform_0, window_bounds = array<i64: 8, 120>}, {pipeline_mode = #tpu.pipeline_mode<synchronous>, transform_indices = @transform_1, window_bounds = array<i64: 1, 120>}, {pipeline_mode = #tpu.pipeline_mode<synchronous>, transform_indices = @transform_2, window_bounds = array<i64: 1, 120>}, {transform_indices = @transform_3, window_bounds = array<i64: 8, 120>}, {transform_indices = @transform_4, window_bounds = array<i64: 8, 120>}]} {
    %c0 = arith.constant 0 : index
    %c0_0 = arith.constant 0 : index
    %0 = vector.load %arg1[%c0, %c0_0] : memref<8x120xf32, #tpu.memory_space<vmem>>, vector<8x120xf32>
    %c0_1 = arith.constant 0 : index
    %c0_2 = arith.constant 0 : index
    %1 = vector.load %arg2[%c0_1, %c0_2] : memref<1x120xf32, #tpu.memory_space<vmem>>, vector<1x120xf32>
    %2 = vector.broadcast %1 : vector<1x120xf32> to vector<8x120xf32>
    %3 = arith.mulf %2, %0 : vector<8x120xf32>
    %c0_3 = arith.constant 0 : index
    %c0_4 = arith.constant 0 : index
    %4 = vector.load %arg4[%c0_3, %c0_4] : memref<8x120xf32, #tpu.memory_space<vmem>>, vector<8x120xf32>
    tpu.vector_store %arg4[%c0_3, %c0_4], %3 {strides = array<i32>} : memref<8x120xf32, #tpu.memory_space<vmem>>, vector<8x120xf32>,
    %c0_5 = arith.constant 0 : index
    %c0_6 = arith.constant 0 : index
    %5 = vector.load %arg3[%c0_5, %c0_6] : memref<1x120xf32, #tpu.memory_space<vmem>>, vector<1x120xf32>
    %6 = vector.broadcast %5 : vector<1x120xf32> to vector<8x120xf32>
    %7 = arith.mulf %6, %0 : vector<8x120xf32>
    %c0_7 = arith.constant 0 : index
    %c0_8 = arith.constant 0 : index
    %8 = vector.load %arg5[%c0_7, %c0_8] : memref<8x120xf32, #tpu.memory_space<vmem>>, vector<8x120xf32>
    tpu.vector_store %arg5[%c0_7, %c0_8], %7 {strides = array<i32>} : memref<8x120xf32, #tpu.memory_space<vmem>>, vector<8x120xf32>,
    return
  }
  func.func @transform_0(%arg0: i32) -> (i32, i32) {
    %c0_i32 = arith.constant 0 : i32
    %c0_i32_0 = arith.constant 0 : i32
    return %arg0, %c0_i32 : i32, i32
  }
  func.func @transform_1(%arg0: i32) -> (i32, i32) {
    %c0_i32 = arith.constant 0 : i32
    %c0_i32_0 = arith.constant 0 : i32
    %c0_i32_1 = arith.constant 0 : i32
    return %c0_i32, %c0_i32_0 : i32, i32
  }
  func.func @transform_2(%arg0: i32) -> (i32, i32) {
    %c0_i32 = arith.constant 0 : i32
    %c0_i32_0 = arith.constant 0 : i32
    %c0_i32_1 = arith.constant 0 : i32
    return %c0_i32, %c0_i32_0 : i32, i32
  }
  func.func @transform_3(%arg0: i32) -> (i32, i32) {
    %c0_i32 = arith.constant 0 : i32
    %c0_i32_0 = arith.constant 0 : i32
    return %arg0, %c0_i32 : i32, i32
  }
  func.func @transform_4(%arg0: i32) -> (i32, i32) {
    %c0_i32 = arith.constant 0 : i32
    %c0_i32_0 = arith.constant 0 : i32
    return %arg0, %c0_i32 : i32, i32
  }
}

</mosaic_0001>

<llo_original>
// kernel: tpu_custom_call.1
$region0: #{tpu_custom_call.1}
  #allocation0 [shape = 'u32[]', space=smem, size = 0x4, offset = 0x4, fixed_abs, tag = 'smem constant byte address 0x4 - core index']
  #allocation1 [shape = 'u32[144,128]{1,0:T(1,128)}', space=vmem, size = 0x12000, scoped, tag = 'internal scratch']
  %s0 = inlined_call_operand.hbm [shape: f32[12,120], index: 0, kind: input, shape index: {}]
  %s1 = inlined_call_operand.vmem [shape: f32[1,120], index: 1, kind: input, shape index: {}]
  %s2 = inlined_call_operand.vmem [shape: f32[1,120], index: 2, kind: input, shape index: {}]
  %s3 = inlined_call_operand.hbm [shape: f32[12,120], index: 3, kind: output, shape index: {0}]
  %s4 = inlined_call_operand.hbm [shape: f32[12,120], index: 4, kind: output, shape index: {1}]
  %5 = xla_tuple %s3, %s4
  %s6 = sld [smem:[#allocation0]]
  $region57: #{tpu_custom_call.1} parent=0
    _
  %s8 = ssub.s32 1, %s6
  %s9 = scalar_select 0, %s8, %s6
  $region1: #{tpu_custom_call.1} parent=0
    #allocation2 [shape = 'u8[8192]{0}', space=vmem, size = 0x2000, scoped, tag = 'input window, operand 0']
    #allocation3 [shape = 's32[2]{0}', space=sflag, size = 0x8, scoped, tag = 'scoped memory for tpu_custom_call.1']
    #allocation4 [shape = 's32[2]{0}', space=sflag, size = 0x8, scoped, tag = 'scoped memory for tpu_custom_call.1']
    #allocation5 [shape = 'u8[8192]{0}', space=vmem, size = 0x2000, scoped, tag = 'output window, operand 0']
    #allocation6 [shape = 'u8[8192]{0}', space=vmem, size = 0x2000, scoped, tag = 'output window, operand 1']
    #allocation7 [shape = 's32[2]{0}', space=sflag, size = 0x8, scoped, tag = 'scoped memory for tpu_custom_call.1']
    %10 = vsyncpa [#allocation3], 0
    %s11 = scalar_lea.sflag [#allocation3], 1
    %12 = vsyncpa %s11, 0
    %13 = vsyncpa [#allocation4], 0
    %s14 = scalar_lea.sflag [#allocation4], 1
    %15 = vsyncpa %s14, 0
    %16 = vsyncpa [#allocation7], 0
    %s17 = scalar_lea.sflag [#allocation7], 1
    %18 = vsyncpa %s17, 0
    loop: start=0, step=1, limit=4
    $region2: #{tpu_custom_call.1} parent=1 // loop_pre_header
      _
    $region3: #{tpu_custom_call.1} parent=1 // loop_header
      %s20 = sphi 0, %s24
      %p21 = scmp.ge.s32.totalorder %s20, 4
      %s30 = sphi 0, %s32
      %s33 = sphi 0, %s30
      %s34 = sphi 0, %s33
      %s50 = sphi 0, %s34
      %s54 = sphi 0, %s54
      %s56 = sphi 0, %s54
      %s57 = sphi 0, %s56
      %s71 = sphi 0, %s57
      %s75 = sphi 0, %s75
      %s77 = sphi 0, %s75
      %s78 = sphi 0, %s77
      %s92 = sphi 0, %s78
      %s98 = sphi 0, %s100
      %s101 = sphi 0, %s98
      %s102 = sphi 0, %s101
      %s118 = sphi 0, %s102
      %s124 = sphi 0, %s126
      %s127 = sphi 0, %s124
      %s128 = sphi 0, %s127
      %s144 = sphi 0, %s128
    $region4: #{tpu_custom_call.1} parent=1 // loop_header_branch
      %23 = sbr.rel (%p21) target = $region8
    $region5: #{tpu_custom_call.1} parent=1 // loop_body
      %s25 = ssub.s32 %s20, 1
      %s26 = ssub.s32 %s20, 2
      %s27 = sadd.s32 %s20, 1
      %s28 = ssub.s32 %s20, %s27
      %p29 = scmp.eq.s32.totalorder %s28, 0
      %s31 = sadd.s32 %s30, 1
      %s32 = scalar_select %p29, %s30, %s31
      %p35 = pneg %p29
      %p36 = scmp.eq.s32.totalorder %s20, 1
      %p37 = por %p35, %p36
      %p38 = scmp.ne.s32.totalorder %s30, %s33
      %p39 = scmp.eq.s32.totalorder %s20, 0
      %p40 = por %p38, %p39
      %p41 = scmp.ne.s32.totalorder %s30, %s33
      %p42 = scmp.eq.s32.totalorder %s25, 1
      %p43 = por %p41, %p42
      %p44 = scmp.ne.s32.totalorder %s33, %s34
      %p45 = scmp.eq.s32.totalorder %s25, 0
      %p46 = por %p44, %p45
      %p47 = scmp.ne.s32.totalorder %s33, %s34
      %p48 = scmp.eq.s32.totalorder %s26, 1
      %p49 = por %p47, %p48
      %p51 = scmp.ne.s32.totalorder %s34, %s50
      %p52 = scmp.eq.s32.totalorder %s26, 0
      %p53 = por %p51, %p52
      %s55 = sadd.s32 %s54, 1
      %p58 = scmp.eq.s32.totalorder %s20, 1
      %p59 = scmp.ne.s32.totalorder %s54, %s56
      %p60 = scmp.eq.s32.totalorder %s20, 0
      %p61 = por %p59, %p60
      %p62 = scmp.ne.s32.totalorder %s54, %s56
      %p63 = scmp.eq.s32.totalorder %s25, 1
      %p64 = por %p62, %p63
      %p65 = scmp.ne.s32.totalorder %s56, %s57
      %p66 = scmp.eq.s32.totalorder %s25, 0
      %p67 = por %p65, %p66
      %p68 = scmp.ne.s32.totalorder %s56, %s57
      %p69 = scmp.eq.s32.totalorder %s26, 1
      %p70 = por %p68, %p69
      %p72 = scmp.ne.s32.totalorder %s57, %s71
      %p73 = scmp.eq.s32.totalorder %s26, 0
      %p74 = por %p72, %p73
      %s76 = sadd.s32 %s75, 1
      %p79 = scmp.eq.s32.totalorder %s20, 1
      %p80 = scmp.ne.s32.totalorder %s75, %s77
      %p81 = scmp.eq.s32.totalorder %s20, 0
      %p82 = por %p80, %p81
      %p83 = scmp.ne.s32.totalorder %s75, %s77
      %p84 = scmp.eq.s32.totalorder %s25, 1
      %p85 = por %p83, %p84
      %p86 = scmp.ne.s32.totalorder %s77, %s78
      %p87 = scmp.eq.s32.totalorder %s25, 0
      %p88 = por %p86, %p87
      %p89 = scmp.ne.s32.totalorder %s77, %s78
      %p90 = scmp.eq.s32.totalorder %s26, 1
      %p91 = por %p89, %p90
      %p93 = scmp.ne.s32.totalorder %s78, %s92
      %p94 = scmp.eq.s32.totalorder %s26, 0
      %p95 = por %p93, %p94
      %s96 = ssub.s32 %s20, %s27
      %p97 = scmp.eq.s32.totalorder %s96, 0
      %s99 = sadd.s32 %s98, 1
      %s100 = scalar_select %p97, %s98, %s99
      %p103 = pneg %p97
      %p104 = scmp.eq.s32.totalorder %s20, 1
      %p105 = por %p103, %p104
      %p106 = scmp.ne.s32.totalorder %s98, %s101
      %p107 = scmp.eq.s32.totalorder %s20, 0
      %p108 = por %p106, %p107
      %p109 = scmp.ne.s32.totalorder %s98, %s101
      %p110 = scmp.eq.s32.totalorder %s25, 1
      %p111 = por %p109, %p110
      %p112 = scmp.ne.s32.totalorder %s101, %s102
      %p113 = scmp.eq.s32.totalorder %s25, 0
      %p114 = por %p112, %p113
      %p115 = scmp.ne.s32.totalorder %s101, %s102
      %p116 = scmp.eq.s32.totalorder %s26, 1
      %p117 = por %p115, %p116
      %p119 = scmp.ne.s32.totalorder %s102, %s118
      %p120 = scmp.eq.s32.totalorder %s26, 0
      %p121 = por %p119, %p120
      %s122 = ssub.s32 %s20, %s27
      %p123 = scmp.eq.s32.totalorder %s122, 0
      %s125 = sadd.s32 %s124, 1
      %s126 = scalar_select %p123, %s124, %s125
      %p129 = pneg %p123
      %p130 = scmp.eq.s32.totalorder %s20, 1
      %p131 = por %p129, %p130
      %p132 = scmp.ne.s32.totalorder %s124, %s127
      %p133 = scmp.eq.s32.totalorder %s20, 0
      %p134 = por %p132, %p133
      %p135 = scmp.ne.s32.totalorder %s124, %s127
      %p136 = scmp.eq.s32.totalorder %s25, 1
      %p137 = por %p135, %p136
      %p138 = scmp.ne.s32.totalorder %s127, %s128
      %p139 = scmp.eq.s32.totalorder %s25, 0
      %p140 = por %p138, %p139
      %p141 = scmp.ne.s32.totalorder %s127, %s128
      %p142 = scmp.eq.s32.totalorder %s26, 1
      %p143 = por %p141, %p142
      %p145 = scmp.ne.s32.totalorder %s128, %s144
      %p146 = scmp.eq.s32.totalorder %s26, 0
      %p147 = por %p145, %p146
      %p148 = scmp.le.s32.totalorder 1, %s20
      %p149 = scmp.lt.s32.totalorder %s20, 3
      %p150 = pnand %p148, %p149
      %p151 = pneg %p150
      // Predicated region
      $region9: #{tpu_custom_call.1} parent=5 // pred_check
        _
      $region10: #{tpu_custom_call.1} parent=5 // pred_check_branch
        %153 = sbr.rel (%p150) target = $region12
      $region11: #{tpu_custom_call.1} parent=5 // pred_region
        %s154 = ssub.s32 %s20, 1
        // Predicated region
        $region13: #{tpu_custom_call.1} parent=11 // pred_check
          %p155 = pneg %p67
        $region14: #{tpu_custom_call.1} parent=11 // pred_check_branch
          %157 = sbr.rel (%p155) target = $region16
        $region15: #{tpu_custom_call.1} parent=11 // pred_region
          _
        $region16: #{tpu_custom_call.1} parent=11 // pred_fallthru
          _
        // Predicated region
        $region17: #{tpu_custom_call.1} parent=11 // pred_check
          %p158 = pneg %p88
        $region18: #{tpu_custom_call.1} parent=11 // pred_check_branch
          %160 = sbr.rel (%p158) target = $region20
        $region19: #{tpu_custom_call.1} parent=11 // pred_region
          _
        $region20: #{tpu_custom_call.1} parent=11 // pred_fallthru
          _
      $region12: #{tpu_custom_call.1} parent=5 // pred_fallthru
        _
      %p161 = scmp.lt.s32.totalorder %s20, 2
      // Predicated region
      $region21: #{tpu_custom_call.1} parent=5 // pred_check
        %p162 = pneg %p161
      $region22: #{tpu_custom_call.1} parent=5 // pred_check_branch
        %164 = sbr.rel (%p162) target = $region24
      $region23: #{tpu_custom_call.1} parent=5 // pred_region
        // Predicated region
        $region25: #{tpu_custom_call.1} parent=23 // pred_check
          %p165 = pneg %p40
        $region26: #{tpu_custom_call.1} parent=23 // pred_check_branch
          %167 = sbr.rel (%p165) target = $region28
        $region27: #{tpu_custom_call.1} parent=23 // pred_region
          %s168 = sand.u32 %s30, 1
          %s169 = scalar_lea.sflag [#allocation3], %s168
          %s170 = sand.u32 %s30, 1
          %s171 = smul.addr %s170, 8
          %s172 = scalar_lea.vmem [#allocation2], %s171
          %s174 = ssub.s32 128, 128
          %175 = vsyncadd %s169, %s174
          %s176 = smul.addr %s20, 128
          %s177 = scalar_lea.hbm %s0, %s176
          %s179 = sshll.u32 %s172, 4
          %s180 = int_to_ptr.vmem [resolvable:$true] %s179
          %182 = dma.hbm_to_vmem [thread:$0]  %s177, 128, %s180, %s169
        $region28: #{tpu_custom_call.1} parent=23 // pred_fallthru
          _
      $region24: #{tpu_custom_call.1} parent=5 // pred_fallthru
        _
      %p183 = scmp.le.s32.totalorder 1, %s20
      %p184 = scmp.lt.s32.totalorder %s20, 3
      %p185 = pnand %p183, %p184
      %p186 = pneg %p185
      // Predicated region
      $region29: #{tpu_custom_call.1} parent=5 // pred_check
        _
      $region30: #{tpu_custom_call.1} parent=5 // pred_check_branch
        %188 = sbr.rel (%p185) target = $region32
      $region31: #{tpu_custom_call.1} parent=5 // pred_region
        %s189 = ssub.s32 %s20, 1
        %s190 = sand.u32 %s33, 1
        %s191 = scalar_lea.sflag [#allocation3], %s190
        %s192 = sand.u32 %s33, 1
        %s193 = smul.addr %s192, 8
        %s194 = scalar_lea.vmem [#allocation2], %s193
        // Predicated region
        $region33: #{tpu_custom_call.1} parent=31 // pred_check
          %p195 = pneg %p46
        $region34: #{tpu_custom_call.1} parent=31 // pred_check_branch
          %197 = sbr.rel (%p195) target = $region36
        $region35: #{tpu_custom_call.1} parent=31 // pred_region
          %198 = dma.done %s191, 128
        $region36: #{tpu_custom_call.1} parent=31 // pred_fallthru
          _
        %s199 = sand.u32 %s33, 1
        %s200 = scalar_lea.sflag [#allocation3], %s199
        %s201 = sand.u32 %s33, 1
        %s202 = smul.addr %s201, 8
        %s203 = scalar_lea.vmem [#allocation2], %s202
        %p204 = pneg %p46
        %p205 = pneg %p43
        %p206 = pneg %p67
        %p207 = pneg %p64
        %p208 = pneg %p88
        %p209 = pneg %p85
        %p210 = pneg %p114
        %p211 = pneg %p111
        %s212 = sand.u32 %s101, 1
        %s213 = scalar_lea.sflag [#allocation4], %s212
        %s214 = sand.u32 %s101, 1
        %s215 = smul.addr %s214, 8
        %s216 = scalar_lea.vmem [#allocation5], %s215
        %p217 = pneg %p140
        %p218 = pneg %p137
        %s219 = sand.u32 %s127, 1
        %s220 = scalar_lea.sflag [#allocation7], %s219
        %s221 = sand.u32 %s127, 1
        %s222 = smul.addr %s221, 8
        %s223 = scalar_lea.vmem [#allocation6], %s222
        %v224 = vld [vmem:[%s194] sm:$0xff]
        %v225 = vld [vmem:[%s1] sm:$0x1]
        %v227 = vlaneseq
        %v228 = vshrl.u32 %v227, 7
        %v229 = vsub.s32 0, %v228
        %v230 = vrot.slane %v225, %v229
        %v232 = vmul.f32 %v230, %v224
        %vm233 = vcmask 982016
        %234 = vst.msk [vmem:[%s216] sm:$0xff] %vm233, %v232
        %v235 = vld [vmem:[%s2] sm:$0x1]
        %v237 = vlaneseq
        %v238 = vshrl.u32 %v237, 7
        %v239 = vsub.s32 0, %v238
        %v240 = vrot.slane %v235, %v239
        %v242 = vmul.f32 %v240, %v224
        %243 = vst.msk [vmem:[%s223] sm:$0xff] %vm233, %v242
        %s244 = sand.u32 %s101, 1
        %s245 = scalar_lea.sflag [#allocation4], %s244
        %s246 = sand.u32 %s101, 1
        %s247 = smul.addr %s246, 8
        %s248 = scalar_lea.vmem [#allocation5], %s247
        %s249 = sand.u32 %s127, 1
        %s250 = scalar_lea.sflag [#allocation7], %s249
        %s251 = sand.u32 %s127, 1
        %s252 = smul.addr %s251, 8
        %s253 = scalar_lea.vmem [#allocation6], %s252
        // Predicated region
        $region37: #{tpu_custom_call.1} parent=31 // pred_check
          %p254 = pneg %p111
        $region38: #{tpu_custom_call.1} parent=31 // pred_check_branch
          %256 = sbr.rel (%p254) target = $region40
        $region39: #{tpu_custom_call.1} parent=31 // pred_region
          %s258 = ssub.s32 128, 128
          %259 = vsyncadd %s245, %s258
          %s260 = smul.addr %s25, 128
          %s261 = scalar_lea.hbm %s3, %s260
          %s263 = sshll.u32 %s248, 4
          %s264 = int_to_ptr.vmem [resolvable:$true] %s263
          %266 = dma.vmem_to_hbm [thread:$0]  %s264, 128, %s261, %s245
        $region40: #{tpu_custom_call.1} parent=31 // pred_fallthru
          _
        // Predicated region
        $region41: #{tpu_custom_call.1} parent=31 // pred_check
          %p267 = pneg %p137
        $region42: #{tpu_custom_call.1} parent=31 // pred_check_branch
          %269 = sbr.rel (%p267) target = $region44
        $region43: #{tpu_custom_call.1} parent=31 // pred_region
          %s271 = ssub.s32 128, 128
          %272 = vsyncadd %s250, %s271
          %s273 = smul.addr %s25, 128
          %s274 = scalar_lea.hbm %s4, %s273
          %s276 = sshll.u32 %s253, 4
          %s277 = int_to_ptr.vmem [resolvable:$true] %s276
          %279 = dma.vmem_to_hbm [thread:$0]  %s277, 128, %s274, %s250
        $region44: #{tpu_custom_call.1} parent=31 // pred_fallthru
          _
      $region32: #{tpu_custom_call.1} parent=5 // pred_fallthru
        _
      %p280 = scmp.le.s32.totalorder 2, %s20
      // Predicated region
      $region45: #{tpu_custom_call.1} parent=5 // pred_check
        %p281 = pneg %p280
      $region46: #{tpu_custom_call.1} parent=5 // pred_check_branch
        %283 = sbr.rel (%p281) target = $region48
      $region47: #{tpu_custom_call.1} parent=5 // pred_region
        %s284 = ssub.s32 %s20, 2
        // Predicated region
        $region49: #{tpu_custom_call.1} parent=47 // pred_check
          %p285 = pneg %p117
        $region50: #{tpu_custom_call.1} parent=47 // pred_check_branch
          %287 = sbr.rel (%p285) target = $region52
        $region51: #{tpu_custom_call.1} parent=47 // pred_region
          %s288 = sand.u32 %s102, 1
          %s289 = scalar_lea.sflag [#allocation4], %s288
          %s290 = sand.u32 %s102, 1
          %s291 = smul.addr %s290, 8
          %s292 = scalar_lea.vmem [#allocation5], %s291
          %293 = dma.done %s289, 128
        $region52: #{tpu_custom_call.1} parent=47 // pred_fallthru
          _
        // Predicated region
        $region53: #{tpu_custom_call.1} parent=47 // pred_check
          %p294 = pneg %p143
        $region54: #{tpu_custom_call.1} parent=47 // pred_check_branch
          %296 = sbr.rel (%p294) target = $region56
        $region55: #{tpu_custom_call.1} parent=47 // pred_region
          %s297 = sand.u32 %s128, 1
          %s298 = scalar_lea.sflag [#allocation7], %s297
          %s299 = sand.u32 %s128, 1
          %s300 = smul.addr %s299, 8
          %s301 = scalar_lea.vmem [#allocation6], %s300
          %302 = dma.done %s298, 128
        $region56: #{tpu_custom_call.1} parent=47 // pred_fallthru
          _
      $region48: #{tpu_custom_call.1} parent=5 // pred_fallthru
        _
    $region6: #{tpu_custom_call.1} parent=1 // loop_footer
      %s24 = sadd.s32 1, %s20
    $region7: #{tpu_custom_call.1} parent=1 // loop_footer_branch
      %19 = sbr.rel target = $region3
    $region8: #{tpu_custom_call.1} parent=1 // loop_exit
      _
    %303 = vsyncpa [#allocation3], 1
    %s304 = scalar_lea.sflag [#allocation3], 1
    %305 = vsyncpa %s304, 1
    %306 = vsyncpa [#allocation4], 1
    %s307 = scalar_lea.sflag [#allocation4], 1
    %308 = vsyncpa %s307, 1
    %309 = vsyncpa [#allocation7], 1
    %s310 = scalar_lea.sflag [#allocation7], 1
    %311 = vsyncpa %s310, 1

</llo_original>
